<compile_context>
chip_gen: v5e
topology: v5e:2x2
jax: 0.10.0
libtpu: 0.0.40
codegen_flags: <defaults>
</compile_context>

<pallas_src>
import functools

import jax
import jax.numpy as jnp
from jax import lax
from jax.experimental import pallas as pl
from jax.experimental.pallas import tpu as pltpu


def _round_up(v, m):
    return ((v + m - 1) // m) * m


def ae_kernel(x_ref,                       # (tb, n) batch tile, natural HBM layout
              w1, w2, w43, w5, w6t,        # resident weights
              bcol_ref,                    # (4h, 1) packed column biases
              b6_ref,                      # (1, n) output-layer bias row
              o_ref,                       # (tb, n) output tile
              *, hidden):
    h = hidden

    def bcol(idx):                         # static slice -> (h, 1) bias column
        return bcol_ref[idx * h:(idx + 1) * h, :]

    x = x_ref[...]                         # (tb, n)

    # Layer 1 (NT): W1 (h, n) contracted with x's feature axis -> (h, tb);
    # the batch lands on the lane axis, so all following elementwise work is
    # lane-dense.
    a = lax.dot_general(w1[...], x, (((1,), (1,)), ((), ())),
                        preferred_element_type=jnp.float32)
    act = jnp.tanh(a + bcol(0))
    # Layer 2
    act = jnp.tanh(jnp.dot(w2[...], act,
                           preferred_element_type=jnp.float32) + bcol(1))
    # Layers 3+4 fused (no nonlinearity between them): W43 = W4 @ W3
    act = jnp.tanh(jnp.dot(w43[...], act,
                           preferred_element_type=jnp.float32) + bcol(2))
    # Layer 5
    act = jnp.tanh(jnp.dot(w5[...], act,
                           preferred_element_type=jnp.float32) + bcol(3))
    # Layer 6 (TN): contract the hidden axis of both operands -> (tb, n),
    # i.e. the output tile comes out already in its natural HBM orientation.
    y = lax.dot_general(act, w6t[...], (((0,), (0,)), ((), ())),
                        preferred_element_type=jnp.float32) + b6_ref[...]
    o_ref[...] = y.astype(o_ref.dtype)


def ae_forward(x, weights, biases, *, block_b=8192):
    """x: (B, n) float32.
    weights: [w1..w6] in PyTorch nn.Linear layout (out_features, in_features).
    biases:  [b1..b6], each (out_features,).
    Returns the (B, n) reconstruction (same semantics as AE.forward)."""
    B, n = x.shape
    w1, w2, w3, w4, w5, w6 = [w.astype(jnp.float32) for w in weights]
    b1, b2, b3, b4, b5, b6 = [b.astype(jnp.float32) for b in biases]
    h = w1.shape[0]

    # Fuse encoder-Linear3 / decoder-Linear1 (no activation between them).
    w43 = w4 @ w3                               # (h, h)
    b43 = w4 @ b3 + b4                          # (h,)
    w6t = w6.T                                  # (h, n): layer 6 becomes a TN dot
    b_cols = jnp.concatenate([b1, b2, b43, b5]).reshape(-1, 1)   # (4h, 1)
    b6_row = b6.reshape(1, -1)                  # (1, n)

    # Batch tile: large enough to amortize per-grid-step overhead; for large B
    # cap it so the grid keeps >= ~8 steps (v7x megacore gets both cores busy).
    if B > 1024:
        tb = min(block_b, max(128, _round_up(pl.cdiv(B, 8), 128)))
    else:
        tb = B                                  # full-extent block (always legal)
    grid = (pl.cdiv(B, tb),)

    def resident(arr):
        nd = arr.ndim
        # Constant block index across the grid -> DMA'd into VMEM exactly once.
        return pl.BlockSpec(arr.shape, lambda i, _nd=nd: (0,) * _nd)

    in_specs = [
        pl.BlockSpec((tb, n), lambda i: (i, 0)),        # x, tiled over batch
        resident(w1), resident(w2), resident(w43),
        resident(w5), resident(w6t),
        resident(b_cols), resident(b6_row),
    ]
    out_spec = pl.BlockSpec((tb, n), lambda i: (i, 0))

    flops = 2 * B * (2 * h * n + 3 * h * h)             # five effective layers
    transcendentals = 4 * B * h                         # four tanh layers
    bytes_accessed = 4 * (2 * B * n
                          + sum(int(w.size) for w in (w1, w2, w43, w5, w6t))
                          + int(b_cols.size) + int(b6_row.size))

    fn = pl.pallas_call(
        functools.partial(ae_kernel, hidden=h),
        out_shape=jax.ShapeDtypeStruct((B, n), x.dtype),
        grid=grid,
        in_specs=in_specs,
        out_specs=out_spec,
        compiler_params=pltpu.CompilerParams(
            dimension_semantics=("parallel",)),          # batch tiles across TCs (v7x)
        cost_estimate=pl.CostEstimate(
            flops=int(flops),
            transcendentals=int(transcendentals),
            bytes_accessed=int(bytes_accessed)),
    )
    return fn(x, w1, w2, w43, w5, w6t, b_cols, b6_row)


def init_linear(key, fan_in, fan_out):
    """PyTorch-style init: U(-1/sqrt(fan_in), 1/sqrt(fan_in)).
    Weight stored as (fan_out, fan_in), matching nn.Linear."""
    kw, kb = jax.random.split(key)
    bound = 1.0 / jnp.sqrt(jnp.float32(fan_in))
    w = jax.random.uniform(kw, (fan_out, fan_in), jnp.float32, -bound, bound)
    b = jax.random.uniform(kb, (fan_out,), jnp.float32, -bound, bound)
    return w, b


def make_ae_params(key, input_size, hidden_size, repr_size):
    dims = [
        (input_size, hidden_size),   # encoder Linear 1
        (hidden_size, hidden_size),  # encoder Linear 2
        (hidden_size, repr_size),    # encoder Linear 3
        (repr_size, hidden_size),    # decoder Linear 1
        (hidden_size, hidden_size),  # decoder Linear 2
        (hidden_size, input_size),   # decoder Linear 3
    ]
    keys = jax.random.split(key, len(dims))
    weights, biases = [], []
    for k, (fi, fo) in zip(keys, dims):
        w, b = init_linear(k, fi, fo)
        weights.append(w)
        biases.append(b)
    return weights, biases


def ae_reference(x, weights, biases):
    """Pure-JAX reference of the same forward pass (PyTorch semantics, unfused)."""
    w1, w2, w3, w4, w5, w6 = weights
    b1, b2, b3, b4, b5, b6 = biases
    h = jnp.tanh(x @ w1.T + b1)
    h = jnp.tanh(h @ w2.T + b2)
    z = h @ w3.T + b3
    h = jnp.tanh(z @ w4.T + b4)
    h = jnp.tanh(h @ w5.T + b5)
    return h @ w6.T + b6


if __name__ == "__main__":
    batch = 8
    input_size = 32
    hidden_size = 32
    repr_size = 16

    key = jax.random.PRNGKey(0)
    kx, kp = jax.random.split(key)

    x = jax.random.normal(kx, (batch, input_size), jnp.float32)
    weights, biases = make_ae_params(kp, input_size, hidden_size, repr_size)

    out = ae_forward(x, weights, biases)
    out = jax.block_until_ready(out)

    ref = ae_reference(x, weights, biases)
    assert out.shape == (batch, input_size)
    assert jnp.allclose(out, ref, atol=1e-5, rtol=1e-5), \
        float(jnp.max(jnp.abs(out - ref)))

    print("KERNEL_OK")
</pallas_src>

<mosaic_0001>
module attributes {stable_mosaic.version = 11 : i64} {
  func.func @ae_kernel(%arg0: i32, %arg1: memref<8x32xf32, #tpu.memory_space<vmem>>, %arg2: memref<32x32xf32, #tpu.memory_space<vmem>>, %arg3: memref<32x32xf32, #tpu.memory_space<vmem>>, %arg4: memref<32x32xf32, #tpu.memory_space<vmem>>, %arg5: memref<32x32xf32, #tpu.memory_space<vmem>>, %arg6: memref<32x32xf32, #tpu.memory_space<vmem>>, %arg7: memref<128x1xf32, #tpu.memory_space<vmem>>, %arg8: memref<1x32xf32, #tpu.memory_space<vmem>>, %arg9: memref<8x32xf32, #tpu.memory_space<vmem>>) attributes {dimension_semantics = [#tpu.dimension_semantics<parallel>], iteration_bounds = array<i64: 1>, scalar_prefetch = 0 : i64, scratch_operands = 0 : i64, tpu.core_type = #tpu.core_type<tc>, window_params = [{transform_indices = @transform_0, window_bounds = array<i64: 8, 32>}, {pipeline_mode = #tpu.pipeline_mode<synchronous>, transform_indices = @transform_1, window_bounds = array<i64: 32, 32>}, {pipeline_mode = #tpu.pipeline_mode<synchronous>, transform_indices = @transform_2, window_bounds = array<i64: 32, 32>}, {pipeline_mode = #tpu.pipeline_mode<synchronous>, transform_indices = @transform_3, window_bounds = array<i64: 32, 32>}, {pipeline_mode = #tpu.pipeline_mode<synchronous>, transform_indices = @transform_4, window_bounds = array<i64: 32, 32>}, {pipeline_mode = #tpu.pipeline_mode<synchronous>, transform_indices = @transform_5, window_bounds = array<i64: 32, 32>}, {pipeline_mode = #tpu.pipeline_mode<synchronous>, transform_indices = @transform_6, window_bounds = array<i64: 128, 1>}, {pipeline_mode = #tpu.pipeline_mode<synchronous>, transform_indices = @transform_7, window_bounds = array<i64: 1, 32>}, {transform_indices = @transform_8, window_bounds = array<i64: 8, 32>}]} {
    %c0 = arith.constant 0 : index
    %c0_0 = arith.constant 0 : index
    %0 = vector.load %arg1[%c0, %c0_0] : memref<8x32xf32, #tpu.memory_space<vmem>>, vector<8x32xf32>
    %c0_1 = arith.constant 0 : index
    %c0_2 = arith.constant 0 : index
    %1 = vector.load %arg2[%c0_1, %c0_2] : memref<32x32xf32, #tpu.memory_space<vmem>>, vector<32x32xf32>
    %cst = arith.constant dense<0.000000e+00> : vector<32x8xf32>
    %2 = tpu.matmul %1, %0, %cst {dimension_numbers = #tpu.dot_dimension_numbers<[1], [1], [0], [0], [0, 0, 1, 0], [], []>} : vector<32x32xf32>, vector<8x32xf32>, vector<32x8xf32> -> vector<32x8xf32>
    %c0_3 = arith.constant 0 : index
    %c0_4 = arith.constant 0 : index
    %3 = vector.load %arg7[%c0_3, %c0_4] : memref<128x1xf32, #tpu.memory_space<vmem>>, vector<32x1xf32>
    %4 = vector.broadcast %3 : vector<32x1xf32> to vector<32x8xf32>
    %5 = arith.addf %2, %4 : vector<32x8xf32>
    %6 = math.tanh %5 : vector<32x8xf32>
    %c0_5 = arith.constant 0 : index
    %c0_6 = arith.constant 0 : index
    %7 = vector.load %arg3[%c0_5, %c0_6] : memref<32x32xf32, #tpu.memory_space<vmem>>, vector<32x32xf32>
    %cst_7 = arith.constant dense<0.000000e+00> : vector<32x8xf32>
    %8 = tpu.matmul %7, %6, %cst_7 {dimension_numbers = #tpu.dot_dimension_numbers<[1], [0], [0], [1], [0, 0, 1, 1], [], []>} : vector<32x32xf32>, vector<32x8xf32>, vector<32x8xf32> -> vector<32x8xf32>
    %c32 = arith.constant 32 : index
    %c0_8 = arith.constant 0 : index
    %9 = vector.load %arg7[%c32, %c0_8] : memref<128x1xf32, #tpu.memory_space<vmem>>, vector<32x1xf32>
    %10 = vector.broadcast %9 : vector<32x1xf32> to vector<32x8xf32>
    %11 = arith.addf %8, %10 : vector<32x8xf32>
    %12 = math.tanh %11 : vector<32x8xf32>
    %c0_9 = arith.constant 0 : index
    %c0_10 = arith.constant 0 : index
    %13 = vector.load %arg4[%c0_9, %c0_10] : memref<32x32xf32, #tpu.memory_space<vmem>>, vector<32x32xf32>
    %cst_11 = arith.constant dense<0.000000e+00> : vector<32x8xf32>
    %14 = tpu.matmul %13, %12, %cst_11 {dimension_numbers = #tpu.dot_dimension_numbers<[1], [0], [0], [1], [0, 0, 1, 1], [], []>} : vector<32x32xf32>, vector<32x8xf32>, vector<32x8xf32> -> vector<32x8xf32>
    %c64 = arith.constant 64 : index
    %c0_12 = arith.constant 0 : index
    %15 = vector.load %arg7[%c64, %c0_12] : memref<128x1xf32, #tpu.memory_space<vmem>>, vector<32x1xf32>
    %16 = vector.broadcast %15 : vector<32x1xf32> to vector<32x8xf32>
    %17 = arith.addf %14, %16 : vector<32x8xf32>
    %18 = math.tanh %17 : vector<32x8xf32>
    %c0_13 = arith.constant 0 : index
    %c0_14 = arith.constant 0 : index
    %19 = vector.load %arg5[%c0_13, %c0_14] : memref<32x32xf32, #tpu.memory_space<vmem>>, vector<32x32xf32>
    %cst_15 = arith.constant dense<0.000000e+00> : vector<32x8xf32>
    %20 = tpu.matmul %19, %18, %cst_15 {dimension_numbers = #tpu.dot_dimension_numbers<[1], [0], [0], [1], [0, 0, 1, 1], [], []>} : vector<32x32xf32>, vector<32x8xf32>, vector<32x8xf32> -> vector<32x8xf32>
    %c96 = arith.constant 96 : index
    %c0_16 = arith.constant 0 : index
    %21 = vector.load %arg7[%c96, %c0_16] : memref<128x1xf32, #tpu.memory_space<vmem>>, vector<32x1xf32>
    %22 = vector.broadcast %21 : vector<32x1xf32> to vector<32x8xf32>
    %23 = arith.addf %20, %22 : vector<32x8xf32>
    %24 = math.tanh %23 : vector<32x8xf32>
    %c0_17 = arith.constant 0 : index
    %c0_18 = arith.constant 0 : index
    %25 = vector.load %arg6[%c0_17, %c0_18] : memref<32x32xf32, #tpu.memory_space<vmem>>, vector<32x32xf32>
    %cst_19 = arith.constant dense<0.000000e+00> : vector<8x32xf32>
    %26 = tpu.matmul %24, %25, %cst_19 {dimension_numbers = #tpu.dot_dimension_numbers<[0], [0], [1], [1], [0, 1, 1, 1], [], []>} : vector<32x8xf32>, vector<32x32xf32>, vector<8x32xf32> -> vector<8x32xf32>
    %c0_20 = arith.constant 0 : index
    %c0_21 = arith.constant 0 : index
    %27 = vector.load %arg8[%c0_20, %c0_21] : memref<1x32xf32, #tpu.memory_space<vmem>>, vector<1x32xf32>
    %28 = vector.broadcast %27 : vector<1x32xf32> to vector<8x32xf32>
    %29 = arith.addf %26, %28 : vector<8x32xf32>
    %c0_22 = arith.constant 0 : index
    %c0_23 = arith.constant 0 : index
    %30 = vector.load %arg9[%c0_22, %c0_23] : memref<8x32xf32, #tpu.memory_space<vmem>>, vector<8x32xf32>
    tpu.vector_store %arg9[%c0_22, %c0_23], %29 {strides = array<i32>} : memref<8x32xf32, #tpu.memory_space<vmem>>, vector<8x32xf32>,
    return
  }
  func.func @transform_0(%arg0: i32) -> (i32, i32) {
    %c0_i32 = arith.constant 0 : i32
    %c0_i32_0 = arith.constant 0 : i32
    return %arg0, %c0_i32 : i32, i32
  }
  func.func @transform_1(%arg0: i32) -> (i32, i32) {
    %c0_i32 = arith.constant 0 : i32
    %c0_i32_0 = arith.constant 0 : i32
    %c0_i32_1 = arith.constant 0 : i32
    return %c0_i32, %c0_i32_0 : i32, i32
  }
  func.func @transform_2(%arg0: i32) -> (i32, i32) {
    %c0_i32 = arith.constant 0 : i32
    %c0_i32_0 = arith.constant 0 : i32
    %c0_i32_1 = arith.constant 0 : i32
    return %c0_i32, %c0_i32_0 : i32, i32
  }
  func.func @transform_3(%arg0: i32) -> (i32, i32) {
    %c0_i32 = arith.constant 0 : i32
    %c0_i32_0 = arith.constant 0 : i32
    %c0_i32_1 = arith.constant 0 : i32
    return %c0_i32, %c0_i32_0 : i32, i32
  }
  func.func @transform_4(%arg0: i32) -> (i32, i32) {
    %c0_i32 = arith.constant 0 : i32
    %c0_i32_0 = arith.constant 0 : i32
    %c0_i32_1 = arith.constant 0 : i32
    return %c0_i32, %c0_i32_0 : i32, i32
  }
  func.func @transform_5(%arg0: i32) -> (i32, i32) {
    %c0_i32 = arith.constant 0 : i32
    %c0_i32_0 = arith.constant 0 : i32
    %c0_i32_1 = arith.constant 0 : i32
    return %c0_i32, %c0_i32_0 : i32, i32
  }
  func.func @transform_6(%arg0: i32) -> (i32, i32) {
    %c0_i32 = arith.constant 0 : i32
    %c0_i32_0 = arith.constant 0 : i32
    %c0_i32_1 = arith.constant 0 : i32
    return %c0_i32, %c0_i32_0 : i32, i32
  }
  func.func @transform_7(%arg0: i32) -> (i32, i32) {
    %c0_i32 = arith.constant 0 : i32
    %c0_i32_0 = arith.constant 0 : i32
    %c0_i32_1 = arith.constant 0 : i32
    return %c0_i32, %c0_i32_0 : i32, i32
  }
  func.func @transform_8(%arg0: i32) -> (i32, i32) {
    %c0_i32 = arith.constant 0 : i32
    %c0_i32_0 = arith.constant 0 : i32
    return %arg0, %c0_i32 : i32, i32
  }
}

</mosaic_0001>

<llo_original>
// kernel: tpu_custom_call.1
$region0: #{tpu_custom_call.1}
  #allocation0 [shape = 'u32[]', space=smem, size = 0x4, offset = 0x4, fixed_abs, tag = 'smem constant byte address 0x4 - core index']
  #allocation1 [shape = 'u32[72,128]{1,0:T(1,128)}', space=vmem, size = 0x9000, scoped, tag = 'internal scratch']
  %s0 = inlined_call_operand.hbm [shape: f32[8,32], index: 0, kind: input, shape index: {}]
  %s1 = inlined_call_operand.vmem [shape: f32[32,32], index: 1, kind: input, shape index: {}]
  %s2 = inlined_call_operand.vmem [shape: f32[32,32], index: 2, kind: input, shape index: {}]
  %s3 = inlined_call_operand.vmem [shape: f32[32,32], index: 3, kind: input, shape index: {}]
  %s4 = inlined_call_operand.vmem [shape: f32[32,32], index: 4, kind: input, shape index: {}]
  %s5 = inlined_call_operand.hbm [shape: f32[32,32], index: 5, kind: input, shape index: {}]
  %s6 = inlined_call_operand.vmem [shape: f32[128,1], index: 6, kind: input, shape index: {}]
  %s7 = inlined_call_operand.vmem [shape: f32[1,32], index: 7, kind: input, shape index: {}]
  %s8 = inlined_call_operand.hbm [shape: f32[8,32], index: 8, kind: output, shape index: {}]
  %s9 = sld [smem:[#allocation0]]
  $region50: #{tpu_custom_call.1} parent=0
    _
  %s11 = ssub.s32 1, %s9
  %s12 = scalar_select 0, %s11, %s9
  $region1: #{tpu_custom_call.1} parent=0
    #allocation2 [shape = 'u8[4096]{0}', space=vmem, size = 0x1000, scoped, tag = 'input window, operand 0, single buffered']
    #allocation3 [shape = 's32[1]{0}', space=sflag, size = 0x4, scoped, tag = 'scoped memory for tpu_custom_call.1']
    #allocation4 [shape = 's32[1]{0}', space=sflag, size = 0x4, scoped, tag = 'scoped memory for tpu_custom_call.1']
    #allocation5 [shape = 'u8[16384]{0}', space=vmem, size = 0x4000, scoped, tag = 'input window, operand 5, single buffered']
    #allocation6 [shape = 's32[1]{0}', space=sflag, size = 0x4, scoped, tag = 'scoped memory for tpu_custom_call.1']
    #allocation7 [shape = 'u8[4096]{0}', space=vmem, size = 0x1000, scoped, tag = 'output window, operand 0, single buffered']
    %13 = vsyncpa [#allocation3], 0
    %14 = vsyncpa [#allocation6], 0
    %15 = vsyncpa [#allocation4], 0
    // Predicated region
    $region2: #{tpu_custom_call.1} parent=1 // pred_check
      _
    $region3: #{tpu_custom_call.1} parent=1 // pred_check_branch
      %17 = sbr.rel (0) target = $region5
    $region4: #{tpu_custom_call.1} parent=1 // pred_region
      %19 = vsyncadd [#allocation3], 0
      %s21 = sshll.u32 %s0, 4
      %s22 = int_to_ptr.hbm [resolvable:$true] %s21
      %s23 = sshll.u32 [#allocation2], 4
      %s24 = int_to_ptr.vmem [resolvable:$true] %s23
      %26 = dma.hbm_to_vmem [thread:$0]  %s22, 128, %s24, [#allocation3]
    $region5: #{tpu_custom_call.1} parent=1 // pred_fallthru
      _
    // Predicated region
    $region6: #{tpu_custom_call.1} parent=1 // pred_check
      _
    $region7: #{tpu_custom_call.1} parent=1 // pred_check_branch
      %28 = sbr.rel (0) target = $region9
    $region8: #{tpu_custom_call.1} parent=1 // pred_region
      _
    $region9: #{tpu_custom_call.1} parent=1 // pred_fallthru
      _
    // Predicated region
    $region10: #{tpu_custom_call.1} parent=1 // pred_check
      _
    $region11: #{tpu_custom_call.1} parent=1 // pred_check_branch
      %30 = sbr.rel (0) target = $region13
    $region12: #{tpu_custom_call.1} parent=1 // pred_region
      _
    $region13: #{tpu_custom_call.1} parent=1 // pred_fallthru
      _
    // Predicated region
    $region14: #{tpu_custom_call.1} parent=1 // pred_check
      _
    $region15: #{tpu_custom_call.1} parent=1 // pred_check_branch
      %32 = sbr.rel (0) target = $region17
    $region16: #{tpu_custom_call.1} parent=1 // pred_region
      _
    $region17: #{tpu_custom_call.1} parent=1 // pred_fallthru
      _
    // Predicated region
    $region18: #{tpu_custom_call.1} parent=1 // pred_check
      _
    $region19: #{tpu_custom_call.1} parent=1 // pred_check_branch
      %34 = sbr.rel (0) target = $region21
    $region20: #{tpu_custom_call.1} parent=1 // pred_region
      _
    $region21: #{tpu_custom_call.1} parent=1 // pred_fallthru
      _
    // Predicated region
    $region22: #{tpu_custom_call.1} parent=1 // pred_check
      _
    $region23: #{tpu_custom_call.1} parent=1 // pred_check_branch
      %36 = sbr.rel (0) target = $region25
    $region24: #{tpu_custom_call.1} parent=1 // pred_region
      %38 = vsyncadd [#allocation6], 0
      %s39 = sshll.u32 %s5, 4
      %s40 = int_to_ptr.hbm [resolvable:$true] %s39
      %s41 = sshll.u32 [#allocation5], 4
      %s42 = int_to_ptr.vmem [resolvable:$true] %s41
      %47 = dma.hbm_to_vmem [thread:$0]  %s40, 512, %s42, [#allocation6], 128, 128, 8
    $region25: #{tpu_custom_call.1} parent=1 // pred_fallthru
      _
    // Predicated region
    $region26: #{tpu_custom_call.1} parent=1 // pred_check
      _
    $region27: #{tpu_custom_call.1} parent=1 // pred_check_branch
      %49 = sbr.rel (0) target = $region29
    $region28: #{tpu_custom_call.1} parent=1 // pred_region
      _
    $region29: #{tpu_custom_call.1} parent=1 // pred_fallthru
      _
    // Predicated region
    $region30: #{tpu_custom_call.1} parent=1 // pred_check
      _
    $region31: #{tpu_custom_call.1} parent=1 // pred_check_branch
      %51 = sbr.rel (0) target = $region33
    $region32: #{tpu_custom_call.1} parent=1 // pred_region
      _
    $region33: #{tpu_custom_call.1} parent=1 // pred_fallthru
      _
    // Predicated region
    $region34: #{tpu_custom_call.1} parent=1 // pred_check
      _
    $region35: #{tpu_custom_call.1} parent=1 // pred_check_branch
      %53 = sbr.rel (0) target = $region37
    $region36: #{tpu_custom_call.1} parent=1 // pred_region
      %55 = dma.done [#allocation3], 128
    $region37: #{tpu_custom_call.1} parent=1 // pred_fallthru
      _
    // Predicated region
    $region38: #{tpu_custom_call.1} parent=1 // pred_check
      _
    $region39: #{tpu_custom_call.1} parent=1 // pred_check_branch
      %57 = sbr.rel (0) target = $region41
    $region40: #{tpu_custom_call.1} parent=1 // pred_region
      %59 = dma.done [#allocation6], 512
    $region41: #{tpu_custom_call.1} parent=1 // pred_fallthru
      _
    %v60 = vld [vmem:[#allocation2] sm:$0xff]
    %v61 = vld [vmem:[%s1] sm:$0xff]
    %v62 = vld [vmem:[%s1 + $0x8] sm:$0xff]
    %v63 = vld [vmem:[%s1 + $0x10] sm:$0xff]
    %v64 = vld [vmem:[%s1 + $0x18] sm:$0xff]
    %v65 = vld [vmem:[%s6] sm:$0xff]
    %v66 = vld [vmem:[%s6 + $0x8] sm:$0xff]
    %v67 = vld [vmem:[%s6 + $0x10] sm:$0xff]
    %v68 = vld [vmem:[%s6 + $0x18] sm:$0xff]
    %70 = vset.pattern.permute.xlu0 0
    %71 = vperm.xlu0 %70, %v65
    %v72 = vpop.permute.xlu0 %71
    %75 = vset.pattern.permute.xlu0 0
    %76 = vperm.xlu0 %75, %v66
    %v77 = vpop.permute.xlu0 %76
    %80 = vset.pattern.permute.xlu0 0
    %81 = vperm.xlu0 %80, %v67
    %v82 = vpop.permute.xlu0 %81
    %85 = vset.pattern.permute.xlu0 0
    %86 = vperm.xlu0 %85, %v68
    %v87 = vpop.permute.xlu0 %86
    %vm89 = vcmask 261120
    %v91 = vsel %vm89, %v61, 0
    %v94 = vsel %vm89, %v62, 0
    %v97 = vsel %vm89, %v63, 0
    %v100 = vsel %vm89, %v64, 0
    %v103 = vsel %vm89, %v60, 0
    %105 = vmatpush.xpose.msra.mxu0 0.0
    %106 = vmatpush.xpose.msra.mxu0 0.0
    %107 = vmatpush.xpose.msra.mxu0 0.0
    %108 = vmatpush.xpose.msra.mxu0 0.0
    %109 = vmatpush.xpose.msra.mxu0 0.0
    %110 = vmatpush.xpose.msra.mxu0 0.0
    %111 = vmatpush.xpose.msra.mxu0 0.0
    %112 = vmatpush.xpose.msra.mxu0 0.0
    %113 = vmatpush.xpose.msra.mxu0 0.0
    %114 = vmatpush.xpose.msra.mxu0 0.0
    %115 = vmatpush.xpose.msra.mxu0 0.0
    %116 = vmatpush.xpose.msra.mxu0 0.0
    %117 = vmatpush.xpose.msra.mxu0 0.0
    %118 = vmatpush.xpose.msra.mxu0 0.0
    %119 = vmatpush.xpose.msra.mxu0 0.0
    %120 = vmatpush.xpose.msra.mxu0 %v103
    %121 = vmatmul.f32.gmra.mxu0 %v91
    %v122 = vpop.f32.mrf.mxu0
    %v123 = vadd.f32 %v72, %v122
    %124 = vmatmul.f32.gmra.mxu0 %v94
    %v125 = vpop.f32.mrf.mxu0
    %v126 = vadd.f32 %v77, %v125
    %127 = vmatmul.f32.gmra.mxu0 %v97
    %v128 = vpop.f32.mrf.mxu0
    %v129 = vadd.f32 %v82, %v128
    %130 = vmatmul.f32.gmra.mxu0 %v100
    %v131 = vpop.f32.mrf.mxu0
    %v132 = vadd.f32 %v87, %v131
    %133 = vdwg.mxu0
    %v134 = vtanh.pop %v123
    %v135 = vtanh.pop %v126
    %v136 = vtanh.pop %v129
    %v137 = vtanh.pop %v132
    %v138 = vld [vmem:[%s2] sm:$0xff]
    %v139 = vld [vmem:[%s2 + $0x8] sm:$0xff]
    %v140 = vld [vmem:[%s2 + $0x10] sm:$0xff]
    %v141 = vld [vmem:[%s2 + $0x18] sm:$0xff]
    %v142 = vld [vmem:[%s6 + $0x20] sm:$0xff]
    %v143 = vld [vmem:[%s6 + $0x28] sm:$0xff]
    %v144 = vld [vmem:[%s6 + $0x30] sm:$0xff]
    %v145 = vld [vmem:[%s6 + $0x38] sm:$0xff]
    %147 = vset.pattern.permute.xlu0 0
    %148 = vperm.xlu0 %147, %v142
    %v149 = vpop.permute.xlu0 %148
    %152 = vset.pattern.permute.xlu0 0
    %153 = vperm.xlu0 %152, %v143
    %v154 = vpop.permute.xlu0 %153
    %157 = vset.pattern.permute.xlu0 0
    %158 = vperm.xlu0 %157, %v144
    %v159 = vpop.permute.xlu0 %158
    %162 = vset.pattern.permute.xlu0 0
    %163 = vperm.xlu0 %162, %v145
    %v164 = vpop.permute.xlu0 %163
    %v167 = vsel %vm89, %v138, 0
    %v170 = vsel %vm89, %v139, 0
    %v173 = vsel %vm89, %v140, 0
    %v176 = vsel %vm89, %v141, 0
    %178 = vmatpush.msra.mxu0 0.0
    %179 = vmatpush.msra.mxu0 0.0
    %180 = vmatpush.msra.mxu0 0.0
    %181 = vmatpush.msra.mxu0 0.0
    %182 = vmatpush.msra.mxu0 0.0
    %183 = vmatpush.msra.mxu0 0.0
    %184 = vmatpush.msra.mxu0 0.0
    %185 = vmatpush.msra.mxu0 0.0
    %186 = vmatpush.msra.mxu0 0.0
    %187 = vmatpush.msra.mxu0 0.0
    %188 = vmatpush.msra.mxu0 0.0
    %189 = vmatpush.msra.mxu0 0.0
    %190 = vmatpush.msra.mxu0 %v137
    %191 = vmatpush.msra.mxu0 %v136
    %192 = vmatpush.msra.mxu0 %v135
    %193 = vmatpush.msra.mxu0 %v134
    %194 = vmatmul.f32.gmra.mxu0 %v167
    %v195 = vpop.f32.mrf.mxu0
    %v196 = vadd.f32 %v149, %v195
    %197 = vmatmul.f32.gmra.mxu0 %v170
    %v198 = vpop.f32.mrf.mxu0
    %v199 = vadd.f32 %v154, %v198
    %200 = vmatmul.f32.gmra.mxu0 %v173
    %v201 = vpop.f32.mrf.mxu0
    %v202 = vadd.f32 %v159, %v201
    %203 = vmatmul.f32.gmra.mxu0 %v176
    %v204 = vpop.f32.mrf.mxu0
    %v205 = vadd.f32 %v164, %v204
    %206 = vdwg.mxu0
    %v207 = vtanh.pop %v196
    %v208 = vtanh.pop %v199
    %v209 = vtanh.pop %v202
    %v210 = vtanh.pop %v205
    %v211 = vld [vmem:[%s3] sm:$0xff]
    %v212 = vld [vmem:[%s3 + $0x8] sm:$0xff]
    %v213 = vld [vmem:[%s3 + $0x10] sm:$0xff]
    %v214 = vld [vmem:[%s3 + $0x18] sm:$0xff]
    %v215 = vld [vmem:[%s6 + $0x40] sm:$0xff]
    %v216 = vld [vmem:[%s6 + $0x48] sm:$0xff]
    %v217 = vld [vmem:[%s6 + $0x50] sm:$0xff]
    %v218 = vld [vmem:[%s6 + $0x58] sm:$0xff]
    %220 = vset.pattern.permute.xlu0 0
    %221 = vperm.xlu0 %220, %v215
    %v222 = vpop.permute.xlu0 %221
    %225 = vset.pattern.permute.xlu0 0
    %226 = vperm.xlu0 %225, %v216
    %v227 = vpop.permute.xlu0 %226
    %230 = vset.pattern.permute.xlu0 0
    %231 = vperm.xlu0 %230, %v217
    %v232 = vpop.permute.xlu0 %231
    %235 = vset.pattern.permute.xlu0 0
    %236 = vperm.xlu0 %235, %v218
    %v237 = vpop.permute.xlu0 %236
    %v240 = vsel %vm89, %v211, 0
    %v243 = vsel %vm89, %v212, 0
    %v246 = vsel %vm89, %v213, 0
    %v249 = vsel %vm89, %v214, 0
    %251 = vmatpush.msra.mxu0 0.0
    %252 = vmatpush.msra.mxu0 0.0
    %253 = vmatpush.msra.mxu0 0.0
    %254 = vmatpush.msra.mxu0 0.0
    %255 = vmatpush.msra.mxu0 0.0
    %256 = vmatpush.msra.mxu0 0.0
    %257 = vmatpush.msra.mxu0 0.0
    %258 = vmatpush.msra.mxu0 0.0
    %259 = vmatpush.msra.mxu0 0.0
    %260 = vmatpush.msra.mxu0 0.0
    %261 = vmatpush.msra.mxu0 0.0
    %262 = vmatpush.msra.mxu0 0.0
    %263 = vmatpush.msra.mxu0 %v210
    %264 = vmatpush.msra.mxu0 %v209
    %265 = vmatpush.msra.mxu0 %v208
    %266 = vmatpush.msra.mxu0 %v207
    %267 = vmatmul.f32.gmra.mxu0 %v240
    %v268 = vpop.f32.mrf.mxu0
    %v269 = vadd.f32 %v222, %v268
    %270 = vmatmul.f32.gmra.mxu0 %v243
    %v271 = vpop.f32.mrf.mxu0
    %v272 = vadd.f32 %v227, %v271
    %273 = vmatmul.f32.gmra.mxu0 %v246
    %v274 = vpop.f32.mrf.mxu0
    %v275 = vadd.f32 %v232, %v274
    %276 = vmatmul.f32.gmra.mxu0 %v249
    %v277 = vpop.f32.mrf.mxu0
    %v278 = vadd.f32 %v237, %v277
    %279 = vdwg.mxu0
    %v280 = vtanh.pop %v269
    %v281 = vtanh.pop %v272
    %v282 = vtanh.pop %v275
    %v283 = vtanh.pop %v278
    %v284 = vld [vmem:[%s4] sm:$0xff]
    %v285 = vld [vmem:[%s4 + $0x8] sm:$0xff]
    %v286 = vld [vmem:[%s4 + $0x10] sm:$0xff]
    %v287 = vld [vmem:[%s4 + $0x18] sm:$0xff]
    %v288 = vld [vmem:[%s6 + $0x60] sm:$0xff]
    %v289 = vld [vmem:[%s6 + $0x68] sm:$0xff]
    %v290 = vld [vmem:[%s6 + $0x70] sm:$0xff]
    %v291 = vld [vmem:[%s6 + $0x78] sm:$0xff]
    %293 = vset.pattern.permute.xlu0 0
    %294 = vperm.xlu0 %293, %v288
    %v295 = vpop.permute.xlu0 %294
    %298 = vset.pattern.permute.xlu0 0
    %299 = vperm.xlu0 %298, %v289
    %v300 = vpop.permute.xlu0 %299
    %303 = vset.pattern.permute.xlu0 0
    %304 = vperm.xlu0 %303, %v290
    %v305 = vpop.permute.xlu0 %304
    %308 = vset.pattern.permute.xlu0 0
    %309 = vperm.xlu0 %308, %v291
    %v310 = vpop.permute.xlu0 %309
    %v313 = vsel %vm89, %v284, 0
    %v316 = vsel %vm89, %v285, 0
    %v319 = vsel %vm89, %v286, 0
    %v322 = vsel %vm89, %v287, 0
    %324 = vmatpush.msra.mxu0 0.0
    %325 = vmatpush.msra.mxu0 0.0
    %326 = vmatpush.msra.mxu0 0.0
    %327 = vmatpush.msra.mxu0 0.0
    %328 = vmatpush.msra.mxu0 0.0
    %329 = vmatpush.msra.mxu0 0.0
    %330 = vmatpush.msra.mxu0 0.0
    %331 = vmatpush.msra.mxu0 0.0
    %332 = vmatpush.msra.mxu0 0.0
    %333 = vmatpush.msra.mxu0 0.0
    %334 = vmatpush.msra.mxu0 0.0
    %335 = vmatpush.msra.mxu0 0.0
    %336 = vmatpush.msra.mxu0 %v283
    %337 = vmatpush.msra.mxu0 %v282
    %338 = vmatpush.msra.mxu0 %v281
    %339 = vmatpush.msra.mxu0 %v280
    %340 = vmatmul.f32.gmra.mxu0 %v313
    %v341 = vpop.f32.mrf.mxu0
    %v342 = vadd.f32 %v295, %v341
    %343 = vmatmul.f32.gmra.mxu0 %v316
    %v344 = vpop.f32.mrf.mxu0
    %v345 = vadd.f32 %v300, %v344
    %346 = vmatmul.f32.gmra.mxu0 %v319
    %v347 = vpop.f32.mrf.mxu0
    %v348 = vadd.f32 %v305, %v347
    %349 = vmatmul.f32.gmra.mxu0 %v322
    %v350 = vpop.f32.mrf.mxu0
    %v351 = vadd.f32 %v310, %v350
    %352 = vdwg.mxu0
    %v353 = vtanh.pop %v342
    %v354 = vtanh.pop %v345
    %v355 = vtanh.pop %v348
    %v356 = vtanh.pop %v351
    %v357 = vld [vmem:[#allocation5] sm:$0xff]
    %v358 = vld [vmem:[#allocation5 + $0x8] sm:$0xff]
    %v359 = vld [vmem:[#allocation5 + $0x10] sm:$0xff]
    %v360 = vld [vmem:[#allocation5 + $0x18] sm:$0xff]
    %v361 = vld [vmem:[%s7] sm:$0x1]
    %v363 = vperm.slane %v361, 0
    %365 = vxpose.xlu0.b32.start [1/16] %v353, 128
    %366 = vxpose.xlu0.b32.cont [2/16] %v354, 128
    %367 = vxpose.xlu0.b32.cont [3/16] %v355, 128
    %368 = vxpose.xlu0.b32.cont [4/16] %v356, 128
    %369 = vxpose.xlu0.b32.cont [5/16] 0.0, 128
    %370 = vxpose.xlu0.b32.cont [6/16] 0.0, 128
    %371 = vxpose.xlu0.b32.cont [7/16] 0.0, 128
    %372 = vxpose.xlu0.b32.cont [8/16] 0.0, 128
    %373 = vxpose.xlu0.b32.cont [9/16] 0.0, 128
    %374 = vxpose.xlu0.b32.cont [10/16] 0.0, 128
    %375 = vxpose.xlu0.b32.cont [11/16] 0.0, 128
    %376 = vxpose.xlu0.b32.cont [12/16] 0.0, 128
    %377 = vxpose.xlu0.b32.cont [13/16] 0.0, 128
    %378 = vxpose.xlu0.b32.cont [14/16] 0.0, 128
    %379 = vxpose.xlu0.b32.cont [15/16] 0.0, 128
    %380 = vxpose.xlu0.b32.end [16/16] 0.0, 128
    %v381 = vpop.trf.xlu0
    %v382 = vpop.trf.xlu0
    %v383 = vpop.trf.xlu0
    %v384 = vpop.trf.xlu0
    %v385 = vpop.trf.xlu0
    %v386 = vpop.trf.xlu0
    %v387 = vpop.trf.xlu0
    %v388 = vpop.trf.xlu0
    %v389 = vpop.trf.xlu0
    %v390 = vpop.trf.xlu0
    %v391 = vpop.trf.xlu0
    %v392 = vpop.trf.xlu0
    %v393 = vpop.trf.xlu0
    %v394 = vpop.trf.xlu0
    %v395 = vpop.trf.xlu0
    %v396 = vpop.trf.xlu0
    %v398 = vsel %vm89, %v381, 0
    %400 = vmatpush.msra.mxu0 0.0
    %401 = vmatpush.msra.mxu0 0.0
    %402 = vmatpush.msra.mxu0 0.0
    %403 = vmatpush.msra.mxu0 0.0
    %404 = vmatpush.msra.mxu0 0.0
    %405 = vmatpush.msra.mxu0 0.0
    %406 = vmatpush.msra.mxu0 0.0
    %407 = vmatpush.msra.mxu0 0.0
    %408 = vmatpush.msra.mxu0 0.0
    %409 = vmatpush.msra.mxu0 0.0
    %410 = vmatpush.msra.mxu0 0.0
    %411 = vmatpush.msra.mxu0 0.0
    %412 = vmatpush.msra.mxu0 %v360
    %413 = vmatpush.msra.mxu0 %v359
    %414 = vmatpush.msra.mxu0 %v358
    %415 = vmatpush.msra.mxu0 %v357
    %416 = vmatmul.f32.gmra.mxu0 %v398
    %v417 = vpop.f32.mrf.mxu0
    %v418 = vadd.f32 %v363, %v417
    %419 = vdwg.mxu0
    %420 = vst.msk [vmem:[#allocation7] sm:$0xff] %vm89, %v418
    // Predicated region
    $region42: #{tpu_custom_call.1} parent=1 // pred_check
      _
    $region43: #{tpu_custom_call.1} parent=1 // pred_check_branch
      %422 = sbr.rel (0) target = $region45
    $region44: #{tpu_custom_call.1} parent=1 // pred_region
      %424 = vsyncadd [#allocation4], 0
      %s426 = sshll.u32 [#allocation7], 4
      %s427 = int_to_ptr.vmem [resolvable:$true] %s426
      %s428 = sshll.u32 %s8, 4
      %s429 = int_to_ptr.hbm [resolvable:$true] %s428
      %431 = dma.vmem_to_hbm [thread:$0]  %s427, 128, %s429, [#allocation4]
    $region45: #{tpu_custom_call.1} parent=1 // pred_fallthru
      _
    // Predicated region
    $region46: #{tpu_custom_call.1} parent=1 // pred_check
      _
    $region47: #{tpu_custom_call.1} parent=1 // pred_check_branch
      %433 = sbr.rel (0) target = $region49
    $region48: #{tpu_custom_call.1} parent=1 // pred_region
      %435 = dma.done [#allocation4], 128
    $region49: #{tpu_custom_call.1} parent=1 // pred_fallthru
      _
    %436 = vsyncpa [#allocation3], 1
    %437 = vsyncpa [#allocation6], 1
    %438 = vsyncpa [#allocation4], 1

</llo_original>
